<compile_context>
chip_gen: v6e
topology: v6e:2x2x1
jax: 0.10.0
libtpu: 0.0.40
codegen_flags: <defaults>
</compile_context>

<pallas_src>
import functools

import jax
import jax.numpy as jnp
import numpy as np
from jax import lax
from jax.experimental import pallas as pl
from jax.experimental.pallas import tpu as pltpu


def _round_up(n: int, m: int) -> int:
    return ((n + m - 1) // m) * m


_SUBLANE = {4: 8, 2: 16, 1: 32}  # itemsize -> sublane multiple for packed dtypes


def _vmem_capacity_bytes() -> int:
    try:
        return int(pltpu.get_tpu_info().vmem_capacity_bytes)
    except Exception:
        return 64 * 1024 * 1024  # conservative (v7x per-TC VMEM)


def _choose_tiles(B, D, itemsize_x, itemsize_y, vmem_cap):
    sub = max(_SUBLANE.get(itemsize_x, 8), _SUBLANE.get(itemsize_y, 8))
    if B <= sub:
        batch_tile = B  # full dim is always a legal block extent
    else:
        batch_tile = min(512, (B // sub) * sub)
        # Ensure the "parallel" batch axis has >= 2 grid steps when there is
        # enough batch to split, so both v7x TensorCores get work.
        if B >= 2 * sub:
            half = _round_up(-(-B // 2), sub)
            batch_tile = min(batch_tile, half)
    # Feature tile: lane-dense, as large as the VMEM budget allows.
    max_ft = 8192 if vmem_cap >= 96 * 1024 * 1024 else 4096
    budget = min(vmem_cap // 2, 48 * 1024 * 1024)
    per_feat_bytes = 2 * batch_tile * (itemsize_x + itemsize_y)  # 2 pipeline bufs
    ft_cap = max(128, (budget // per_feat_bytes) // 128 * 128)
    feature_tile = min(max_ft, ft_cap, _round_up(D, 128))
    return batch_tile, feature_tile


def _smooth_l1_kernel(x_ref, y_ref, out_ref, *, d_actual, feature_tile, nk):
    """Grid = (batch_tiles, feature_tiles); feature axis is the reduction.

    out_ref is a lane-resident (batch_tile, 128) accumulator held across the
    reduction axis (same output block index for every k).
    """
    k = pl.program_id(1)

    @pl.when(k == 0)
    def _():
        out_ref[...] = jnp.zeros_like(out_ref)

    n_chunks = feature_tile // 128

    def chunk_val(j, col_base, mask_tail):
        # Fused per-chunk compute: slice -> cast -> huber -> (mask) ; only a
        # few vregs live at a time (no full-tile temporaries).
        xz = x_ref[:, j * 128:(j + 1) * 128].astype(jnp.float32)
        yz = y_ref[:, j * 128:(j + 1) * 128].astype(jnp.float32)
        z = xz - yz
        absz = jnp.abs(z)
        val = jnp.where(absz < 0.01, 0.5 * z * z, 0.01 * (absz - 0.005))
        if mask_tail:
            col = col_base + lax.broadcasted_iota(jnp.int32, val.shape, 1)
            val = jnp.where(col < d_actual, val, 0.0)
        return val

    def accumulate_full():
        partial = out_ref[...]
        for j in range(n_chunks):
            partial = partial + chunk_val(j, 0, False)
        out_ref[...] = partial

    def accumulate_last():
        # Last reduction step: static chunk offsets, so fully-OOB chunks are
        # skipped and only the crossing chunk pays for the lane mask.
        base = (nk - 1) * feature_tile
        partial = out_ref[...]
        for j in range(n_chunks):
            start = base + j * 128
            if start >= d_actual:
                break
            need_mask = (start + 128) > d_actual
            partial = partial + chunk_val(j, start, need_mask)
        out_ref[...] = partial

    ragged = (d_actual % feature_tile) != 0
    if not ragged:
        accumulate_full()
    elif nk == 1:
        accumulate_last()
    else:
        @pl.when(k < nk - 1)
        def _():
            accumulate_full()

        @pl.when(k == nk - 1)
        def _():
            accumulate_last()


def smooth_l1_loss(x, y, mask=None, *, batch_tile=None, feature_tile=None):
    """Reproduces SmoothL1Loss.forward (size_average arg unused in torch code)."""
    assert x.shape == y.shape
    B = x.shape[0]

    xf = x.reshape(B, -1)
    yf = y.reshape(B, -1)
    D = xf.shape[1]

    isx = jnp.dtype(x.dtype).itemsize
    isy = jnp.dtype(y.dtype).itemsize
    vmem_cap = _vmem_capacity_bytes()

    bt_auto, ft_auto = _choose_tiles(B, D, isx, isy, vmem_cap)
    if batch_tile is None:
        batch_tile = bt_auto
    if feature_tile is None:
        feature_tile = ft_auto
    assert feature_tile % 128 == 0

    nb = pl.cdiv(B, batch_tile)
    nk = pl.cdiv(D, feature_tile)
    # TODO(synk): for tiny-B workloads (nb == 1) a v7x could additionally split
    # the reduction across a leading parallel axis to feed its second core.

    cost = pl.CostEstimate(
        flops=5 * B * D,
        transcendentals=0,
        bytes_accessed=B * D * (isx + isy) + B * 128 * 4,
    )

    vmem_limit = min(vmem_cap * 3 // 4, 96 * 1024 * 1024)

    # Lane-dense (B, 128) partial sums; final 128-lane reduce + mean in XLA.
    partial = pl.pallas_call(
        functools.partial(
            _smooth_l1_kernel, d_actual=D, feature_tile=feature_tile, nk=nk
        ),
        out_shape=jax.ShapeDtypeStruct((B, 128), jnp.float32),
        grid_spec=pltpu.PrefetchScalarGridSpec(
            num_scalar_prefetch=0,
            grid=(nb, nk),
            in_specs=[
                pl.BlockSpec((batch_tile, feature_tile), lambda i, k: (i, k)),
                pl.BlockSpec((batch_tile, feature_tile), lambda i, k: (i, k)),
            ],
            out_specs=pl.BlockSpec((batch_tile, 128), lambda i, k: (i, 0)),
        ),
        compiler_params=pltpu.CompilerParams(
            dimension_semantics=("parallel", "arbitrary"),
            vmem_limit_bytes=int(vmem_limit),
        ),
        cost_estimate=cost,
    )(xf, yf)

    total_loss = partial.sum(axis=-1) * (1.0 / D)  # shape (B,), float32

    if mask is not None:
        mask = mask.astype(jnp.float32)
        return (total_loss * mask).sum() / (mask.sum() + 1e-08)
    return total_loss.mean()


def _smooth_l1_loss_ref(x, y, mask=None):
    """Pure-JAX reference mirroring the PyTorch module."""
    B = x.shape[0]
    z = (x.reshape(B, -1) - y.reshape(B, -1)).astype(jnp.float32)
    absz = jnp.abs(z)
    val = jnp.where(absz < 0.01, 0.5 * z * z, 0.01 * (absz - 0.005))
    total = jnp.mean(val, axis=-1)
    if mask is not None:
        mask = mask.astype(jnp.float32)
        return (total * mask).sum() / (mask.sum() + 1e-08)
    return total.mean()


if __name__ == "__main__":
    key = jax.random.PRNGKey(0)
    kx, ky, km = jax.random.split(key, 3)

    B, C, H, W = 2, 4, 16, 16
    # small values so both the |z|<0.01 (quadratic) and |z|>=0.01 (linear)
    # branches fire
    x = jax.random.normal(kx, (B, C, H, W), dtype=jnp.float32) * 0.02
    y = jax.random.normal(ky, (B, C, H, W), dtype=jnp.float32) * 0.02

    # no-mask path (total_loss.mean())
    loss = smooth_l1_loss(x, y)
    jax.block_until_ready(loss)
    np.testing.assert_allclose(
        np.asarray(loss), np.asarray(_smooth_l1_loss_ref(x, y)),
        rtol=1e-4, atol=1e-7)

    # masked path ((total_loss * mask).sum() / (mask.sum() + 1e-8))
    mask = (jax.random.uniform(km, (B,)) > 0.5).astype(jnp.float32)
    loss_masked = smooth_l1_loss(x, y, mask)
    jax.block_until_ready(loss_masked)
    np.testing.assert_allclose(
        np.asarray(loss_masked), np.asarray(_smooth_l1_loss_ref(x, y, mask)),
        rtol=1e-4, atol=1e-7)

    print("KERNEL_OK")
</pallas_src>

<mosaic_0001>
module attributes {stable_mosaic.version = 11 : i64} {
  func.func @_smooth_l1_kernel(%arg0: i32, %arg1: i32, %arg2: memref<2x1024xf32, #tpu.memory_space<vmem>>, %arg3: memref<2x1024xf32, #tpu.memory_space<vmem>>, %arg4: memref<2x128xf32, #tpu.memory_space<vmem>>) attributes {dimension_semantics = [#tpu.dimension_semantics<parallel>, #tpu.dimension_semantics<arbitrary>], iteration_bounds = array<i64: 1, 1>, scalar_prefetch = 0 : i64, scratch_operands = 0 : i64, tpu.core_type = #tpu.core_type<tc>, window_params = [{transform_indices = @transform_0, window_bounds = array<i64: 2, 1024>}, {transform_indices = @transform_1, window_bounds = array<i64: 2, 1024>}, {transform_indices = @transform_2, window_bounds = array<i64: 2, 128>}]} {
    %c0_i32 = arith.constant 0 : i32
    %0 = arith.cmpi eq, %arg1, %c0_i32 : i32
    %1 = arith.extui %0 : i1 to i32
    %c0_i32_0 = arith.constant 0 : i32
    %2 = arith.cmpi ne, %1, %c0_i32_0 : i32
    scf.if %2 {
      %cst_60 = arith.constant 0.000000e+00 : f32
      %125 = vector.broadcast %cst_60 : f32 to vector<2x128xf32>
      %c0_61 = arith.constant 0 : index
      %c0_62 = arith.constant 0 : index
      %126 = vector.load %arg4[%c0_61, %c0_62] : memref<2x128xf32, #tpu.memory_space<vmem>>, vector<2x128xf32>
      tpu.vector_store %arg4[%c0_61, %c0_62], %125 {strides = array<i32>} : memref<2x128xf32, #tpu.memory_space<vmem>>, vector<2x128xf32>,
    } else {
    }
    %c0 = arith.constant 0 : index
    %c0_1 = arith.constant 0 : index
    %3 = vector.load %arg4[%c0, %c0_1] : memref<2x128xf32, #tpu.memory_space<vmem>>, vector<2x128xf32>
    %c0_2 = arith.constant 0 : index
    %c0_3 = arith.constant 0 : index
    %4 = vector.load %arg2[%c0_2, %c0_3] : memref<2x1024xf32, #tpu.memory_space<vmem>>, vector<2x128xf32>
    %c0_4 = arith.constant 0 : index
    %c0_5 = arith.constant 0 : index
    %5 = vector.load %arg3[%c0_4, %c0_5] : memref<2x1024xf32, #tpu.memory_space<vmem>>, vector<2x128xf32>
    %6 = arith.subf %4, %5 : vector<2x128xf32>
    %7 = math.absf %6 : vector<2x128xf32>
    %cst = arith.constant 0.00999999977 : f32
    %8 = vector.broadcast %cst : f32 to vector<2x128xf32>
    %9 = arith.cmpf olt, %7, %8 : vector<2x128xf32>
    %cst_6 = arith.constant 5.000000e-01 : f32
    %10 = vector.broadcast %cst_6 : f32 to vector<2x128xf32>
    %11 = arith.mulf %10, %6 : vector<2x128xf32>
    %12 = arith.mulf %11, %6 : vector<2x128xf32>
    %cst_7 = arith.constant 5.000000e-03 : f32
    %13 = vector.broadcast %cst_7 : f32 to vector<2x128xf32>
    %14 = arith.subf %7, %13 : vector<2x128xf32>
    %cst_8 = arith.constant 0.00999999977 : f32
    %15 = vector.broadcast %cst_8 : f32 to vector<2x128xf32>
    %16 = arith.mulf %15, %14 : vector<2x128xf32>
    %17 = arith.select %9, %12, %16 : vector<2x128xi1>, vector<2x128xf32>
    %18 = arith.addf %3, %17 : vector<2x128xf32>
    %c0_9 = arith.constant 0 : index
    %c128 = arith.constant 128 : index
    %19 = vector.load %arg2[%c0_9, %c128] : memref<2x1024xf32, #tpu.memory_space<vmem>>, vector<2x128xf32>
    %c0_10 = arith.constant 0 : index
    %c128_11 = arith.constant 128 : index
    %20 = vector.load %arg3[%c0_10, %c128_11] : memref<2x1024xf32, #tpu.memory_space<vmem>>, vector<2x128xf32>
    %21 = arith.subf %19, %20 : vector<2x128xf32>
    %22 = math.absf %21 : vector<2x128xf32>
    %cst_12 = arith.constant 0.00999999977 : f32
    %23 = vector.broadcast %cst_12 : f32 to vector<2x128xf32>
    %24 = arith.cmpf olt, %22, %23 : vector<2x128xf32>
    %cst_13 = arith.constant 5.000000e-01 : f32
    %25 = vector.broadcast %cst_13 : f32 to vector<2x128xf32>
    %26 = arith.mulf %25, %21 : vector<2x128xf32>
    %27 = arith.mulf %26, %21 : vector<2x128xf32>
    %cst_14 = arith.constant 5.000000e-03 : f32
    %28 = vector.broadcast %cst_14 : f32 to vector<2x128xf32>
    %29 = arith.subf %22, %28 : vector<2x128xf32>
    %cst_15 = arith.constant 0.00999999977 : f32
    %30 = vector.broadcast %cst_15 : f32 to vector<2x128xf32>
    %31 = arith.mulf %30, %29 : vector<2x128xf32>
    %32 = arith.select %24, %27, %31 : vector<2x128xi1>, vector<2x128xf32>
    %33 = arith.addf %18, %32 : vector<2x128xf32>
    %c0_16 = arith.constant 0 : index
    %c256 = arith.constant 256 : index
    %34 = vector.load %arg2[%c0_16, %c256] : memref<2x1024xf32, #tpu.memory_space<vmem>>, vector<2x128xf32>
    %c0_17 = arith.constant 0 : index
    %c256_18 = arith.constant 256 : index
    %35 = vector.load %arg3[%c0_17, %c256_18] : memref<2x1024xf32, #tpu.memory_space<vmem>>, vector<2x128xf32>
    %36 = arith.subf %34, %35 : vector<2x128xf32>
    %37 = math.absf %36 : vector<2x128xf32>
    %cst_19 = arith.constant 0.00999999977 : f32
    %38 = vector.broadcast %cst_19 : f32 to vector<2x128xf32>
    %39 = arith.cmpf olt, %37, %38 : vector<2x128xf32>
    %cst_20 = arith.constant 5.000000e-01 : f32
    %40 = vector.broadcast %cst_20 : f32 to vector<2x128xf32>
    %41 = arith.mulf %40, %36 : vector<2x128xf32>
    %42 = arith.mulf %41, %36 : vector<2x128xf32>
    %cst_21 = arith.constant 5.000000e-03 : f32
    %43 = vector.broadcast %cst_21 : f32 to vector<2x128xf32>
    %44 = arith.subf %37, %43 : vector<2x128xf32>
    %cst_22 = arith.constant 0.00999999977 : f32
    %45 = vector.broadcast %cst_22 : f32 to vector<2x128xf32>
    %46 = arith.mulf %45, %44 : vector<2x128xf32>
    %47 = arith.select %39, %42, %46 : vector<2x128xi1>, vector<2x128xf32>
    %48 = arith.addf %33, %47 : vector<2x128xf32>
    %c0_23 = arith.constant 0 : index
    %c384 = arith.constant 384 : index
    %49 = vector.load %arg2[%c0_23, %c384] : memref<2x1024xf32, #tpu.memory_space<vmem>>, vector<2x128xf32>
    %c0_24 = arith.constant 0 : index
    %c384_25 = arith.constant 384 : index
    %50 = vector.load %arg3[%c0_24, %c384_25] : memref<2x1024xf32, #tpu.memory_space<vmem>>, vector<2x128xf32>
    %51 = arith.subf %49, %50 : vector<2x128xf32>
    %52 = math.absf %51 : vector<2x128xf32>
    %cst_26 = arith.constant 0.00999999977 : f32
    %53 = vector.broadcast %cst_26 : f32 to vector<2x128xf32>
    %54 = arith.cmpf olt, %52, %53 : vector<2x128xf32>
    %cst_27 = arith.constant 5.000000e-01 : f32
    %55 = vector.broadcast %cst_27 : f32 to vector<2x128xf32>
    %56 = arith.mulf %55, %51 : vector<2x128xf32>
    %57 = arith.mulf %56, %51 : vector<2x128xf32>
    %cst_28 = arith.constant 5.000000e-03 : f32
    %58 = vector.broadcast %cst_28 : f32 to vector<2x128xf32>
    %59 = arith.subf %52, %58 : vector<2x128xf32>
    %cst_29 = arith.constant 0.00999999977 : f32
    %60 = vector.broadcast %cst_29 : f32 to vector<2x128xf32>
    %61 = arith.mulf %60, %59 : vector<2x128xf32>
    %62 = arith.select %54, %57, %61 : vector<2x128xi1>, vector<2x128xf32>
    %63 = arith.addf %48, %62 : vector<2x128xf32>
    %c0_30 = arith.constant 0 : index
    %c512 = arith.constant 512 : index
    %64 = vector.load %arg2[%c0_30, %c512] : memref<2x1024xf32, #tpu.memory_space<vmem>>, vector<2x128xf32>
    %c0_31 = arith.constant 0 : index
    %c512_32 = arith.constant 512 : index
    %65 = vector.load %arg3[%c0_31, %c512_32] : memref<2x1024xf32, #tpu.memory_space<vmem>>, vector<2x128xf32>
    %66 = arith.subf %64, %65 : vector<2x128xf32>
    %67 = math.absf %66 : vector<2x128xf32>
    %cst_33 = arith.constant 0.00999999977 : f32
    %68 = vector.broadcast %cst_33 : f32 to vector<2x128xf32>
    %69 = arith.cmpf olt, %67, %68 : vector<2x128xf32>
    %cst_34 = arith.constant 5.000000e-01 : f32
    %70 = vector.broadcast %cst_34 : f32 to vector<2x128xf32>
    %71 = arith.mulf %70, %66 : vector<2x128xf32>
    %72 = arith.mulf %71, %66 : vector<2x128xf32>
    %cst_35 = arith.constant 5.000000e-03 : f32
    %73 = vector.broadcast %cst_35 : f32 to vector<2x128xf32>
    %74 = arith.subf %67, %73 : vector<2x128xf32>
    %cst_36 = arith.constant 0.00999999977 : f32
    %75 = vector.broadcast %cst_36 : f32 to vector<2x128xf32>
    %76 = arith.mulf %75, %74 : vector<2x128xf32>
    %77 = arith.select %69, %72, %76 : vector<2x128xi1>, vector<2x128xf32>
    %78 = arith.addf %63, %77 : vector<2x128xf32>
    %c0_37 = arith.constant 0 : index
    %c640 = arith.constant 640 : index
    %79 = vector.load %arg2[%c0_37, %c640] : memref<2x1024xf32, #tpu.memory_space<vmem>>, vector<2x128xf32>
    %c0_38 = arith.constant 0 : index
    %c640_39 = arith.constant 640 : index
    %80 = vector.load %arg3[%c0_38, %c640_39] : memref<2x1024xf32, #tpu.memory_space<vmem>>, vector<2x128xf32>
    %81 = arith.subf %79, %80 : vector<2x128xf32>
    %82 = math.absf %81 : vector<2x128xf32>
    %cst_40 = arith.constant 0.00999999977 : f32
    %83 = vector.broadcast %cst_40 : f32 to vector<2x128xf32>
    %84 = arith.cmpf olt, %82, %83 : vector<2x128xf32>
    %cst_41 = arith.constant 5.000000e-01 : f32
    %85 = vector.broadcast %cst_41 : f32 to vector<2x128xf32>
    %86 = arith.mulf %85, %81 : vector<2x128xf32>
    %87 = arith.mulf %86, %81 : vector<2x128xf32>
    %cst_42 = arith.constant 5.000000e-03 : f32
    %88 = vector.broadcast %cst_42 : f32 to vector<2x128xf32>
    %89 = arith.subf %82, %88 : vector<2x128xf32>
    %cst_43 = arith.constant 0.00999999977 : f32
    %90 = vector.broadcast %cst_43 : f32 to vector<2x128xf32>
    %91 = arith.mulf %90, %89 : vector<2x128xf32>
    %92 = arith.select %84, %87, %91 : vector<2x128xi1>, vector<2x128xf32>
    %93 = arith.addf %78, %92 : vector<2x128xf32>
    %c0_44 = arith.constant 0 : index
    %c768 = arith.constant 768 : index
    %94 = vector.load %arg2[%c0_44, %c768] : memref<2x1024xf32, #tpu.memory_space<vmem>>, vector<2x128xf32>
    %c0_45 = arith.constant 0 : index
    %c768_46 = arith.constant 768 : index
    %95 = vector.load %arg3[%c0_45, %c768_46] : memref<2x1024xf32, #tpu.memory_space<vmem>>, vector<2x128xf32>
    %96 = arith.subf %94, %95 : vector<2x128xf32>
    %97 = math.absf %96 : vector<2x128xf32>
    %cst_47 = arith.constant 0.00999999977 : f32
    %98 = vector.broadcast %cst_47 : f32 to vector<2x128xf32>
    %99 = arith.cmpf olt, %97, %98 : vector<2x128xf32>
    %cst_48 = arith.constant 5.000000e-01 : f32
    %100 = vector.broadcast %cst_48 : f32 to vector<2x128xf32>
    %101 = arith.mulf %100, %96 : vector<2x128xf32>
    %102 = arith.mulf %101, %96 : vector<2x128xf32>
    %cst_49 = arith.constant 5.000000e-03 : f32
    %103 = vector.broadcast %cst_49 : f32 to vector<2x128xf32>
    %104 = arith.subf %97, %103 : vector<2x128xf32>
    %cst_50 = arith.constant 0.00999999977 : f32
    %105 = vector.broadcast %cst_50 : f32 to vector<2x128xf32>
    %106 = arith.mulf %105, %104 : vector<2x128xf32>
    %107 = arith.select %99, %102, %106 : vector<2x128xi1>, vector<2x128xf32>
    %108 = arith.addf %93, %107 : vector<2x128xf32>
    %c0_51 = arith.constant 0 : index
    %c896 = arith.constant 896 : index
    %109 = vector.load %arg2[%c0_51, %c896] : memref<2x1024xf32, #tpu.memory_space<vmem>>, vector<2x128xf32>
    %c0_52 = arith.constant 0 : index
    %c896_53 = arith.constant 896 : index
    %110 = vector.load %arg3[%c0_52, %c896_53] : memref<2x1024xf32, #tpu.memory_space<vmem>>, vector<2x128xf32>
    %111 = arith.subf %109, %110 : vector<2x128xf32>
    %112 = math.absf %111 : vector<2x128xf32>
    %cst_54 = arith.constant 0.00999999977 : f32
    %113 = vector.broadcast %cst_54 : f32 to vector<2x128xf32>
    %114 = arith.cmpf olt, %112, %113 : vector<2x128xf32>
    %cst_55 = arith.constant 5.000000e-01 : f32
    %115 = vector.broadcast %cst_55 : f32 to vector<2x128xf32>
    %116 = arith.mulf %115, %111 : vector<2x128xf32>
    %117 = arith.mulf %116, %111 : vector<2x128xf32>
    %cst_56 = arith.constant 5.000000e-03 : f32
    %118 = vector.broadcast %cst_56 : f32 to vector<2x128xf32>
    %119 = arith.subf %112, %118 : vector<2x128xf32>
    %cst_57 = arith.constant 0.00999999977 : f32
    %120 = vector.broadcast %cst_57 : f32 to vector<2x128xf32>
    %121 = arith.mulf %120, %119 : vector<2x128xf32>
    %122 = arith.select %114, %117, %121 : vector<2x128xi1>, vector<2x128xf32>
    %123 = arith.addf %108, %122 : vector<2x128xf32>
    %c0_58 = arith.constant 0 : index
    %c0_59 = arith.constant 0 : index
    %124 = vector.load %arg4[%c0_58, %c0_59] : memref<2x128xf32, #tpu.memory_space<vmem>>, vector<2x128xf32>
    tpu.vector_store %arg4[%c0_58, %c0_59], %123 {strides = array<i32>} : memref<2x128xf32, #tpu.memory_space<vmem>>, vector<2x128xf32>,
    return
  }
  func.func @transform_0(%arg0: i32, %arg1: i32) -> (i32, i32) {
    %c0_i32 = arith.constant 0 : i32
    return %arg0, %arg1 : i32, i32
  }
  func.func @transform_1(%arg0: i32, %arg1: i32) -> (i32, i32) {
    %c0_i32 = arith.constant 0 : i32
    return %arg0, %arg1 : i32, i32
  }
  func.func @transform_2(%arg0: i32, %arg1: i32) -> (i32, i32) {
    %c0_i32 = arith.constant 0 : i32
    %c0_i32_0 = arith.constant 0 : i32
    return %arg0, %c0_i32 : i32, i32
  }
}

</mosaic_0001>

<llo_original>
// kernel: tpu_custom_call.1
$region0: #{tpu_custom_call.1}
  #allocation0 [shape = 'u32[]', space=smem, size = 0x4, offset = 0x4, fixed_abs, tag = 'smem constant byte address 0x4 - core index']
  #allocation1 [shape = 'u32[144,128]{1,0:T(1,128)}', space=vmem, size = 0x12000, scoped, tag = 'internal scratch']
  %s0 = inlined_call_operand.hbm [shape: f32[2,1024], index: 0, kind: input, shape index: {}]
  %s1 = inlined_call_operand.hbm [shape: f32[2,1024], index: 1, kind: input, shape index: {}]
  %s2 = inlined_call_operand.hbm [shape: f32[2,128], index: 2, kind: output, shape index: {}]
  %s3 = sld [smem:[#allocation0]]
  $region30: #{tpu_custom_call.1} parent=0
    _
  %s5 = ssub.s32 1, %s3
  %s6 = scalar_select 0, %s5, %s3
  $region1: #{tpu_custom_call.1} parent=0
    #allocation2 [shape = 'u8[8192]{0}', space=vmem, size = 0x2000, scoped, tag = 'input window, operand 0, single buffered']
    #allocation3 [shape = 's32[1]{0}', space=sflag, size = 0x4, scoped, tag = 'scoped memory for tpu_custom_call.1']
    #allocation4 [shape = 's32[1]{0}', space=sflag, size = 0x4, scoped, tag = 'scoped memory for tpu_custom_call.1']
    #allocation5 [shape = 'u8[8192]{0}', space=vmem, size = 0x2000, scoped, tag = 'input window, operand 1, single buffered']
    #allocation6 [shape = 's32[1]{0}', space=sflag, size = 0x4, scoped, tag = 'scoped memory for tpu_custom_call.1']
    #allocation7 [shape = 'u8[1024]{0}', space=vmem, size = 0x400, scoped, tag = 'output window, operand 0, single buffered']
    %7 = vsyncpa [#allocation3], 0
    %8 = vsyncpa [#allocation6], 0
    %9 = vsyncpa [#allocation4], 0
    // Predicated region
    $region2: #{tpu_custom_call.1} parent=1 // pred_check
      _
    $region3: #{tpu_custom_call.1} parent=1 // pred_check_branch
      %11 = sbr.rel (0) target = $region5
    $region4: #{tpu_custom_call.1} parent=1 // pred_region
      %s13 = ssub.s32 256, 256
      %14 = vsyncadd [#allocation3], %s13
      %s16 = sshll.u32 [#allocation2], 4
      %s17 = int_to_ptr.vmem [resolvable:$true] %s16
      %19 = dma.hbm_to_vmem [thread:$0]  %s0, 256, %s17, [#allocation3]
    $region5: #{tpu_custom_call.1} parent=1 // pred_fallthru
      _
    // Predicated region
    $region6: #{tpu_custom_call.1} parent=1 // pred_check
      _
    $region7: #{tpu_custom_call.1} parent=1 // pred_check_branch
      %21 = sbr.rel (0) target = $region9
    $region8: #{tpu_custom_call.1} parent=1 // pred_region
      %s23 = ssub.s32 256, 256
      %24 = vsyncadd [#allocation6], %s23
      %s26 = sshll.u32 [#allocation5], 4
      %s27 = int_to_ptr.vmem [resolvable:$true] %s26
      %29 = dma.hbm_to_vmem [thread:$0]  %s1, 256, %s27, [#allocation6]
    $region9: #{tpu_custom_call.1} parent=1 // pred_fallthru
      _
    // Predicated region
    $region10: #{tpu_custom_call.1} parent=1 // pred_check
      _
    $region11: #{tpu_custom_call.1} parent=1 // pred_check_branch
      %31 = sbr.rel (0) target = $region13
    $region12: #{tpu_custom_call.1} parent=1 // pred_region
      %32 = dma.done [#allocation3], 256
    $region13: #{tpu_custom_call.1} parent=1 // pred_fallthru
      _
    // Predicated region
    $region14: #{tpu_custom_call.1} parent=1 // pred_check
      _
    $region15: #{tpu_custom_call.1} parent=1 // pred_check_branch
      %34 = sbr.rel (0) target = $region17
    $region16: #{tpu_custom_call.1} parent=1 // pred_region
      %35 = dma.done [#allocation6], 256
    $region17: #{tpu_custom_call.1} parent=1 // pred_fallthru
      _
    %p36 = scmp.eq.s32.totalorder 0, 0
    // Predicated region
    $region18: #{tpu_custom_call.1} parent=1 // pred_check
      %p37 = pneg %p36
    $region19: #{tpu_custom_call.1} parent=1 // pred_check_branch
      %39 = sbr.rel (%p37) target = $region21
    $region20: #{tpu_custom_call.1} parent=1 // pred_region
      %40 = vst [vmem:[#allocation7] sm:$0x3] 0.0
    $region21: #{tpu_custom_call.1} parent=1 // pred_fallthru
      _
    %v41 = vld [vmem:[#allocation7] sm:$0x3]
    %v42 = vld [vmem:[#allocation2] sm:$0x3]
    %v43 = vld [vmem:[#allocation5] sm:$0x3]
    %v44 = vsub.f32 %v42, %v43
    %v45 = vand.u32 2147483647, %v44
    %vm46 = vcmp.lt.f32.partialorder %v45, 0.01
    %v47 = vmul.f32 %v44, 0.5
    %v48 = vmul.f32 %v47, %v44
    %v49 = vsub.f32 %v45, 0.005
    %v50 = vmul.f32 %v49, 0.01
    %v51 = vsel %vm46, %v48, %v50
    %v52 = vadd.f32 %v41, %v51
    %v53 = vld [vmem:[#allocation2 + $0x2] sm:$0x3]
    %v54 = vld [vmem:[#allocation5 + $0x2] sm:$0x3]
    %v55 = vsub.f32 %v53, %v54
    %v56 = vand.u32 2147483647, %v55
    %vm57 = vcmp.lt.f32.partialorder %v56, 0.01
    %v58 = vmul.f32 %v55, 0.5
    %v59 = vmul.f32 %v58, %v55
    %v60 = vsub.f32 %v56, 0.005
    %v61 = vmul.f32 %v60, 0.01
    %v62 = vsel %vm57, %v59, %v61
    %v63 = vadd.f32 %v52, %v62
    %v64 = vld [vmem:[#allocation2 + $0x4] sm:$0x3]
    %v65 = vld [vmem:[#allocation5 + $0x4] sm:$0x3]
    %v66 = vsub.f32 %v64, %v65
    %v67 = vand.u32 2147483647, %v66
    %vm68 = vcmp.lt.f32.partialorder %v67, 0.01
    %v69 = vmul.f32 %v66, 0.5
    %v70 = vmul.f32 %v69, %v66
    %v71 = vsub.f32 %v67, 0.005
    %v72 = vmul.f32 %v71, 0.01
    %v73 = vsel %vm68, %v70, %v72
    %v74 = vadd.f32 %v63, %v73
    %v75 = vld [vmem:[#allocation2 + $0x6] sm:$0x3]
    %v76 = vld [vmem:[#allocation5 + $0x6] sm:$0x3]
    %v77 = vsub.f32 %v75, %v76
    %v78 = vand.u32 2147483647, %v77
    %vm79 = vcmp.lt.f32.partialorder %v78, 0.01
    %v80 = vmul.f32 %v77, 0.5
    %v81 = vmul.f32 %v80, %v77
    %v82 = vsub.f32 %v78, 0.005
    %v83 = vmul.f32 %v82, 0.01
    %v84 = vsel %vm79, %v81, %v83
    %v85 = vadd.f32 %v74, %v84
    %v86 = vld [vmem:[#allocation2 + $0x8] sm:$0x3]
    %v87 = vld [vmem:[#allocation5 + $0x8] sm:$0x3]
    %v88 = vsub.f32 %v86, %v87
    %v89 = vand.u32 2147483647, %v88
    %vm90 = vcmp.lt.f32.partialorder %v89, 0.01
    %v91 = vmul.f32 %v88, 0.5
    %v92 = vmul.f32 %v91, %v88
    %v93 = vsub.f32 %v89, 0.005
    %v94 = vmul.f32 %v93, 0.01
    %v95 = vsel %vm90, %v92, %v94
    %v96 = vadd.f32 %v85, %v95
    %v97 = vld [vmem:[#allocation2 + $0xa] sm:$0x3]
    %v98 = vld [vmem:[#allocation5 + $0xa] sm:$0x3]
    %v99 = vsub.f32 %v97, %v98
    %v100 = vand.u32 2147483647, %v99
    %vm101 = vcmp.lt.f32.partialorder %v100, 0.01
    %v102 = vmul.f32 %v99, 0.5
    %v103 = vmul.f32 %v102, %v99
    %v104 = vsub.f32 %v100, 0.005
    %v105 = vmul.f32 %v104, 0.01
    %v106 = vsel %vm101, %v103, %v105
    %v107 = vadd.f32 %v96, %v106
    %v108 = vld [vmem:[#allocation2 + $0xc] sm:$0x3]
    %v109 = vld [vmem:[#allocation5 + $0xc] sm:$0x3]
    %v110 = vsub.f32 %v108, %v109
    %v111 = vand.u32 2147483647, %v110
    %vm112 = vcmp.lt.f32.partialorder %v111, 0.01
    %v113 = vmul.f32 %v110, 0.5
    %v114 = vmul.f32 %v113, %v110
    %v115 = vsub.f32 %v111, 0.005
    %v116 = vmul.f32 %v115, 0.01
    %v117 = vsel %vm112, %v114, %v116
    %v118 = vadd.f32 %v107, %v117
    %v119 = vld [vmem:[#allocation2 + $0xe] sm:$0x3]
    %v120 = vld [vmem:[#allocation5 + $0xe] sm:$0x3]
    %v121 = vsub.f32 %v119, %v120
    %v122 = vand.u32 2147483647, %v121
    %vm123 = vcmp.lt.f32.partialorder %v122, 0.01
    %v124 = vmul.f32 %v121, 0.5
    %v125 = vmul.f32 %v124, %v121
    %v126 = vsub.f32 %v122, 0.005
    %v127 = vmul.f32 %v126, 0.01
    %v128 = vsel %vm123, %v125, %v127
    %v129 = vadd.f32 %v118, %v128
    %130 = vst [vmem:[#allocation7] sm:$0x3] %v129
    // Predicated region
    $region22: #{tpu_custom_call.1} parent=1 // pred_check
      _
    $region23: #{tpu_custom_call.1} parent=1 // pred_check_branch
      %132 = sbr.rel (0) target = $region25
    $region24: #{tpu_custom_call.1} parent=1 // pred_region
      %s134 = ssub.s32 32, 32
      %135 = vsyncadd [#allocation4], %s134
      %s137 = sshll.u32 [#allocation7], 4
      %s138 = int_to_ptr.vmem [resolvable:$true] %s137
      %140 = dma.vmem_to_hbm [thread:$0]  %s138, 32, %s2, [#allocation4]
    $region25: #{tpu_custom_call.1} parent=1 // pred_fallthru
      _
    // Predicated region
    $region26: #{tpu_custom_call.1} parent=1 // pred_check
      _
    $region27: #{tpu_custom_call.1} parent=1 // pred_check_branch
      %142 = sbr.rel (0) target = $region29
    $region28: #{tpu_custom_call.1} parent=1 // pred_region
      %143 = dma.done [#allocation4], 32
    $region29: #{tpu_custom_call.1} parent=1 // pred_fallthru
      _
    %144 = vsyncpa [#allocation3], 1
    %145 = vsyncpa [#allocation6], 1
    %146 = vsyncpa [#allocation4], 1

</llo_original>
